<compile_context>
chip_gen: v5e
topology: v5e:2x2
jax: 0.10.0
libtpu: 0.0.40
codegen_flags: <defaults>
</compile_context>

<pallas_src>
import functools

import jax
import jax.numpy as jnp
from jax.experimental import pallas as pl
from jax.experimental.pallas import tpu as pltpu

LN_EPS = 1e-5     # PyTorch nn.LayerNorm default eps
LANE = 128        # vreg lane width
SUBLANE = 8       # vreg sublane count


def _round_up(n, m):
    return ((n + m - 1) // m) * m


def _layernorm_onepass(h, gamma, beta, n_true):
    """LayerNorm over the TRUE feature count.

    Assumes padded lanes of `h` are exactly zero, so sum/sumsq over the padded
    width equal the sums over the true features.  gamma/beta are zero on the
    padded lanes, which keeps padded lanes of the result at zero.
    """
    inv_n = 1.0 / float(n_true)
    s = jnp.sum(h, axis=-1, keepdims=True)
    sq = jnp.sum(h * h, axis=-1, keepdims=True)
    mu = s * inv_n
    var = jnp.maximum(sq * inv_n - mu * mu, 0.0)
    return (h - mu) * jax.lax.rsqrt(var + LN_EPS) * gamma + beta


def mlp_kernel(x_ref,
               w1_ref, p1_ref,      # p1 rows: 0=bias, 1=gamma, 2=beta
               w2_ref, p2_ref,      # p2 rows: 0=bias, 1=gamma, 2=beta
               w3_ref, b3_ref,
               o_ref,
               *, f1_true, f2_true):
    mm_dtype = w1_ref.dtype          # f32 (default) or bf16 (v6e/v7x option)

    # fc1a -> bn1a (LayerNorm) -> relu.  x is at its TRUE feature width; the
    # K<128 matmul is fine (the MXU is nowhere near the bottleneck here).
    x = x_ref[...].astype(mm_dtype)
    h = jnp.dot(x, w1_ref[...], preferred_element_type=jnp.float32)
    h = h + p1_ref[0:1, :]
    h = _layernorm_onepass(h, p1_ref[1:2, :], p1_ref[2:3, :], f1_true)
    h = jnp.maximum(h, 0.0)

    # fc2a -> bn2a (LayerNorm) -> relu
    h = jnp.dot(h.astype(mm_dtype), w2_ref[...],
                preferred_element_type=jnp.float32)
    h = h + p2_ref[0:1, :]
    h = _layernorm_onepass(h, p2_ref[1:2, :], p2_ref[2:3, :], f2_true)
    h = jnp.maximum(h, 0.0)

    # mua (output at true width out_d)
    out = jnp.dot(h.astype(mm_dtype), w3_ref[...],
                  preferred_element_type=jnp.float32)
    out = out + b3_ref[0:1, :]
    o_ref[...] = out.astype(o_ref.dtype)


def pad_and_pack_params(params, weight_dtype=jnp.float32):
    """Pad HIDDEN feature dims to 128 lanes; pack bias/gamma/beta per LN layer.

    The input feature dim and the output dim are kept at their true widths
    (the kernel reads x and writes the result unpadded).  Matmul weights may
    optionally be cast to bf16 (recommended on v6e/v7x, not v5e); bias / LN
    params stay f32.

    Returns (packed_params, dims) where dims = (in_d, fc1_d, fc2_d, out_d)
    are the true (unpadded) feature counts.
    """
    (w1, b1, g1, be1, w2, b2, g2, be2, w3, b3) = params
    in_d, f1 = w1.shape
    f2 = w2.shape[1]
    out_d = w3.shape[1]
    f1_p = _round_up(f1, LANE)
    f2_p = _round_up(f2, LANE)

    def pad2(a, rows, cols):
        return jnp.pad(a, ((0, rows - a.shape[0]), (0, cols - a.shape[1])))

    w1p = pad2(w1, in_d, f1_p).astype(weight_dtype)
    w2p = pad2(w2, f1_p, f2_p).astype(weight_dtype)
    w3p = pad2(w3, f2_p, out_d).astype(weight_dtype)
    # packed per-layer row params: row0=bias, row1=gamma, row2=beta, rest zero
    # (padded gamma/beta lanes are zero -> padded activation lanes stay zero)
    p1 = pad2(jnp.concatenate([b1, g1, be1], axis=0), SUBLANE, f1_p)
    p2 = pad2(jnp.concatenate([b2, g2, be2], axis=0), SUBLANE, f2_p)
    b3p = pad2(b3, SUBLANE, out_d)

    dims = (in_d, f1, f2, out_d)
    return (w1p, p1, w2p, p2, w3p, b3p), dims


def _choose_batch_tiling(B, batch_tile):
    """Pick (tile_rows, num_steps, padded_batch).

    Keeps tiles 8-aligned (sublanes) and, when the batch is large enough,
    guarantees at least 2 grid steps so the "parallel" grid axis can be
    sharded across both v7x TensorCores instead of leaving one idle.
    """
    b8 = _round_up(max(B, 1), SUBLANE)
    tb = min(_round_up(int(batch_tile), SUBLANE), b8)
    nb = (b8 + tb - 1) // tb
    if nb == 1 and b8 >= 2 * SUBLANE:
        tb = _round_up((b8 + 1) // 2, SUBLANE)   # two equal tiles
        nb = 2
    # NOTE: for very large batches on v7x an even nb balances the two cores;
    # we do not force it here since a padded extra step costs time on v5e/v6e.
    return tb, nb, nb * tb


@functools.partial(jax.jit, static_argnames=("dims", "batch_tile"))
def network_forward(x, packed_params, *, dims, batch_tile=512):
    (w1p, p1, w2p, p2, w3p, b3p) = packed_params
    in_d, f1, f2, out_d = dims

    B = x.shape[0]
    tb, nb, bp = _choose_batch_tiling(B, batch_tile)

    # Only batch rows are padded (cheap (B, in_d) op); feature dim stays true.
    xp = x.astype(jnp.float32)
    if bp != B:
        xp = jnp.pad(xp, ((0, bp - B), (0, 0)))

    # Weights / packed params: constant index_map -> DMA'd once (the pipeline
    # skips copies when the block index is unchanged), VMEM-resident after.
    const2 = lambda a: pl.BlockSpec(a.shape, lambda i: (0, 0))

    kernel = functools.partial(mlp_kernel, f1_true=f1, f2_true=f2)

    out_padded = pl.pallas_call(
        kernel,
        out_shape=jax.ShapeDtypeStruct((bp, out_d), jnp.float32),
        grid=(nb,),
        in_specs=[pl.BlockSpec((tb, in_d), lambda i: (i, 0)),   # x: true width
                  const2(w1p), const2(p1),
                  const2(w2p), const2(p2),
                  const2(w3p), const2(b3p)],
        out_specs=pl.BlockSpec((tb, out_d), lambda i: (i, 0)),  # true width
        compiler_params=pltpu.CompilerParams(
            dimension_semantics=("parallel",),          # megacore on v7x
            vmem_limit_bytes=32 * 1024 * 1024,          # >> footprint; guardrail
        ),
    )(xp, w1p, p1, w2p, p2, w3p, b3p)

    return out_padded if bp == B else out_padded[:B]


def init_params(key, input_dims, fc1_dims, fc2_dims, out_dim):
    """Deterministic init mirroring the PyTorch __init__ ranges."""
    ks = jax.random.split(key, 6)
    f1 = 1.0 / jnp.sqrt(jnp.float32(fc1_dims))   # fc1a.weight.size()[0] == fc1_dims
    f2 = 1.0 / jnp.sqrt(jnp.float32(fc2_dims))   # fc2a.weight.size()[0] == fc2_dims
    f3 = 0.003

    # stored as (in, out) for x @ W
    w1 = jax.random.uniform(ks[0], (input_dims, fc1_dims), jnp.float32, -f1, f1)
    b1 = jax.random.uniform(ks[1], (1, fc1_dims), jnp.float32, -f1, f1)
    w2 = jax.random.uniform(ks[2], (fc1_dims, fc2_dims), jnp.float32, -f2, f2)
    b2 = jax.random.uniform(ks[3], (1, fc2_dims), jnp.float32, -f2, f2)
    w3 = jax.random.uniform(ks[4], (fc2_dims, out_dim), jnp.float32, -f3, f3)
    b3 = jax.random.uniform(ks[5], (1, out_dim), jnp.float32, -f3, f3)

    # LayerNorm params: PyTorch default init (ones / zeros)
    g1 = jnp.ones((1, fc1_dims), jnp.float32)
    be1 = jnp.zeros((1, fc1_dims), jnp.float32)
    g2 = jnp.ones((1, fc2_dims), jnp.float32)
    be2 = jnp.zeros((1, fc2_dims), jnp.float32)

    return (w1, b1, g1, be1, w2, b2, g2, be2, w3, b3)


def _layernorm_ref(h, gamma, beta):
    mu = jnp.mean(h, axis=-1, keepdims=True)
    var = jnp.mean((h - mu) * (h - mu), axis=-1, keepdims=True)
    return (h - mu) * jax.lax.rsqrt(var + LN_EPS) * gamma + beta


def reference_forward(x, params):
    (w1, b1, g1, be1, w2, b2, g2, be2, w3, b3) = params
    h = x @ w1 + b1
    h = _layernorm_ref(h, g1, be1)
    h = jnp.maximum(h, 0.0)
    h = h @ w2 + b2
    h = _layernorm_ref(h, g2, be2)
    h = jnp.maximum(h, 0.0)
    return h @ w3 + b3


if __name__ == "__main__":
    # Small shapes consistent with the module; B=200 with the default 512-row
    # tile is split into 2 equal 104-row steps (nb >= 2 rule), exercising a
    # multi-step grid and the padded-batch-row slice.
    B, input_dims, fc1_dims, fc2_dims, out_dim = 200, 16, 32, 32, 8

    key = jax.random.PRNGKey(0)
    kx, kp = jax.random.split(key)
    x = jax.random.normal(kx, (B, input_dims), jnp.float32)
    params = init_params(kp, input_dims, fc1_dims, fc2_dims, out_dim)

    # Default f32 weights (tight correctness check; required on v5e).  On
    # v6e/v7x pass weight_dtype=jnp.bfloat16 to halve weight DMA bytes.
    packed_params, dims = pad_and_pack_params(params)

    out = network_forward(x, packed_params, dims=dims, batch_tile=512)
    out = jax.block_until_ready(out)

    ref = reference_forward(x, params)
    assert out.shape == (B, out_dim)
    assert jnp.allclose(out, ref, atol=1e-4, rtol=1e-4), float(
        jnp.max(jnp.abs(out - ref)))

    print("KERNEL_OK")
</pallas_src>

<mosaic_0001>
module attributes {stable_mosaic.version = 11 : i64} {
  func.func @mlp_kernel(%arg0: i32, %arg1: memref<104x16xf32, #tpu.memory_space<vmem>>, %arg2: memref<16x128xf32, #tpu.memory_space<vmem>>, %arg3: memref<8x128xf32, #tpu.memory_space<vmem>>, %arg4: memref<128x128xf32, #tpu.memory_space<vmem>>, %arg5: memref<8x128xf32, #tpu.memory_space<vmem>>, %arg6: memref<128x8xf32, #tpu.memory_space<vmem>>, %arg7: memref<8x8xf32, #tpu.memory_space<vmem>>, %arg8: memref<104x8xf32, #tpu.memory_space<vmem>>) attributes {dimension_semantics = [#tpu.dimension_semantics<parallel>], iteration_bounds = array<i64: 2>, scalar_prefetch = 0 : i64, scratch_operands = 0 : i64, tpu.core_type = #tpu.core_type<tc>, window_params = [{transform_indices = @transform_0, window_bounds = array<i64: 104, 16>}, {pipeline_mode = #tpu.pipeline_mode<synchronous>, transform_indices = @transform_1, window_bounds = array<i64: 16, 128>}, {pipeline_mode = #tpu.pipeline_mode<synchronous>, transform_indices = @transform_2, window_bounds = array<i64: 8, 128>}, {pipeline_mode = #tpu.pipeline_mode<synchronous>, transform_indices = @transform_3, window_bounds = array<i64: 128, 128>}, {pipeline_mode = #tpu.pipeline_mode<synchronous>, transform_indices = @transform_4, window_bounds = array<i64: 8, 128>}, {pipeline_mode = #tpu.pipeline_mode<synchronous>, transform_indices = @transform_5, window_bounds = array<i64: 128, 8>}, {pipeline_mode = #tpu.pipeline_mode<synchronous>, transform_indices = @transform_6, window_bounds = array<i64: 8, 8>}, {transform_indices = @transform_7, window_bounds = array<i64: 104, 8>}]} {
    %c0 = arith.constant 0 : index
    %c0_0 = arith.constant 0 : index
    %0 = vector.load %arg1[%c0, %c0_0] : memref<104x16xf32, #tpu.memory_space<vmem>>, vector<104x16xf32>
    %c0_1 = arith.constant 0 : index
    %c0_2 = arith.constant 0 : index
    %1 = vector.load %arg2[%c0_1, %c0_2] : memref<16x128xf32, #tpu.memory_space<vmem>>, vector<16x128xf32>
    %cst = arith.constant dense<0.000000e+00> : vector<104x128xf32>
    %2 = tpu.matmul %0, %1, %cst {dimension_numbers = #tpu.dot_dimension_numbers<[1], [0], [0], [1], [0, 0, 1, 1], [], []>} : vector<104x16xf32>, vector<16x128xf32>, vector<104x128xf32> -> vector<104x128xf32>
    %c0_3 = arith.constant 0 : index
    %c0_4 = arith.constant 0 : index
    %3 = vector.load %arg3[%c0_3, %c0_4] : memref<8x128xf32, #tpu.memory_space<vmem>>, vector<1x128xf32>
    %4 = vector.broadcast %3 : vector<1x128xf32> to vector<104x128xf32>
    %5 = arith.addf %2, %4 : vector<104x128xf32>
    %c1 = arith.constant 1 : index
    %c0_5 = arith.constant 0 : index
    %6 = vector.load %arg3[%c1, %c0_5] : memref<8x128xf32, #tpu.memory_space<vmem>>, vector<1x128xf32>
    %c2 = arith.constant 2 : index
    %c0_6 = arith.constant 0 : index
    %7 = vector.load %arg3[%c2, %c0_6] : memref<8x128xf32, #tpu.memory_space<vmem>>, vector<1x128xf32>
    %cst_7 = arith.constant dense<0.000000e+00> : vector<104xf32>
    %8 = vector.multi_reduction <add>, %5, %cst_7 [1] : vector<104x128xf32> to vector<104xf32>
    %9 = vector.shape_cast %8 : vector<104xf32> to vector<104x1xf32>
    %10 = arith.mulf %5, %5 : vector<104x128xf32>
    %cst_8 = arith.constant dense<0.000000e+00> : vector<104xf32>
    %11 = vector.multi_reduction <add>, %10, %cst_8 [1] : vector<104x128xf32> to vector<104xf32>
    %12 = vector.shape_cast %11 : vector<104xf32> to vector<104x1xf32>
    %cst_9 = arith.constant 3.125000e-02 : f32
    %13 = vector.broadcast %cst_9 : f32 to vector<104x1xf32>
    %14 = arith.mulf %9, %13 : vector<104x1xf32>
    %cst_10 = arith.constant 3.125000e-02 : f32
    %15 = vector.broadcast %cst_10 : f32 to vector<104x1xf32>
    %16 = arith.mulf %12, %15 : vector<104x1xf32>
    %17 = arith.mulf %14, %14 : vector<104x1xf32>
    %18 = arith.subf %16, %17 : vector<104x1xf32>
    %cst_11 = arith.constant 0.000000e+00 : f32
    %19 = vector.broadcast %cst_11 : f32 to vector<104x1xf32>
    %20 = arith.maximumf %18, %19 : vector<104x1xf32>
    %21 = vector.broadcast %14 : vector<104x1xf32> to vector<104x128xf32>
    %22 = arith.subf %5, %21 : vector<104x128xf32>
    %cst_12 = arith.constant 9.99999974E-6 : f32
    %23 = vector.broadcast %cst_12 : f32 to vector<104x1xf32>
    %24 = arith.addf %20, %23 : vector<104x1xf32>
    %25 = math.rsqrt %24 : vector<104x1xf32>
    %26 = vector.broadcast %25 : vector<104x1xf32> to vector<104x128xf32>
    %27 = arith.mulf %22, %26 : vector<104x128xf32>
    %28 = vector.broadcast %6 : vector<1x128xf32> to vector<104x128xf32>
    %29 = arith.mulf %27, %28 : vector<104x128xf32>
    %30 = vector.broadcast %7 : vector<1x128xf32> to vector<104x128xf32>
    %31 = arith.addf %29, %30 : vector<104x128xf32>
    %cst_13 = arith.constant 0.000000e+00 : f32
    %32 = vector.broadcast %cst_13 : f32 to vector<104x128xf32>
    %33 = arith.maximumf %31, %32 : vector<104x128xf32>
    %c0_14 = arith.constant 0 : index
    %c0_15 = arith.constant 0 : index
    %34 = vector.load %arg4[%c0_14, %c0_15] : memref<128x128xf32, #tpu.memory_space<vmem>>, vector<128x128xf32>
    %cst_16 = arith.constant dense<0.000000e+00> : vector<104x128xf32>
    %35 = tpu.matmul %33, %34, %cst_16 {dimension_numbers = #tpu.dot_dimension_numbers<[1], [0], [0], [1], [0, 0, 1, 1], [], []>} : vector<104x128xf32>, vector<128x128xf32>, vector<104x128xf32> -> vector<104x128xf32>
    %c0_17 = arith.constant 0 : index
    %c0_18 = arith.constant 0 : index
    %36 = vector.load %arg5[%c0_17, %c0_18] : memref<8x128xf32, #tpu.memory_space<vmem>>, vector<1x128xf32>
    %37 = vector.broadcast %36 : vector<1x128xf32> to vector<104x128xf32>
    %38 = arith.addf %35, %37 : vector<104x128xf32>
    %c1_19 = arith.constant 1 : index
    %c0_20 = arith.constant 0 : index
    %39 = vector.load %arg5[%c1_19, %c0_20] : memref<8x128xf32, #tpu.memory_space<vmem>>, vector<1x128xf32>
    %c2_21 = arith.constant 2 : index
    %c0_22 = arith.constant 0 : index
    %40 = vector.load %arg5[%c2_21, %c0_22] : memref<8x128xf32, #tpu.memory_space<vmem>>, vector<1x128xf32>
    %cst_23 = arith.constant dense<0.000000e+00> : vector<104xf32>
    %41 = vector.multi_reduction <add>, %38, %cst_23 [1] : vector<104x128xf32> to vector<104xf32>
    %42 = vector.shape_cast %41 : vector<104xf32> to vector<104x1xf32>
    %43 = arith.mulf %38, %38 : vector<104x128xf32>
    %cst_24 = arith.constant dense<0.000000e+00> : vector<104xf32>
    %44 = vector.multi_reduction <add>, %43, %cst_24 [1] : vector<104x128xf32> to vector<104xf32>
    %45 = vector.shape_cast %44 : vector<104xf32> to vector<104x1xf32>
    %cst_25 = arith.constant 3.125000e-02 : f32
    %46 = vector.broadcast %cst_25 : f32 to vector<104x1xf32>
    %47 = arith.mulf %42, %46 : vector<104x1xf32>
    %cst_26 = arith.constant 3.125000e-02 : f32
    %48 = vector.broadcast %cst_26 : f32 to vector<104x1xf32>
    %49 = arith.mulf %45, %48 : vector<104x1xf32>
    %50 = arith.mulf %47, %47 : vector<104x1xf32>
    %51 = arith.subf %49, %50 : vector<104x1xf32>
    %cst_27 = arith.constant 0.000000e+00 : f32
    %52 = vector.broadcast %cst_27 : f32 to vector<104x1xf32>
    %53 = arith.maximumf %51, %52 : vector<104x1xf32>
    %54 = vector.broadcast %47 : vector<104x1xf32> to vector<104x128xf32>
    %55 = arith.subf %38, %54 : vector<104x128xf32>
    %cst_28 = arith.constant 9.99999974E-6 : f32
    %56 = vector.broadcast %cst_28 : f32 to vector<104x1xf32>
    %57 = arith.addf %53, %56 : vector<104x1xf32>
    %58 = math.rsqrt %57 : vector<104x1xf32>
    %59 = vector.broadcast %58 : vector<104x1xf32> to vector<104x128xf32>
    %60 = arith.mulf %55, %59 : vector<104x128xf32>
    %61 = vector.broadcast %39 : vector<1x128xf32> to vector<104x128xf32>
    %62 = arith.mulf %60, %61 : vector<104x128xf32>
    %63 = vector.broadcast %40 : vector<1x128xf32> to vector<104x128xf32>
    %64 = arith.addf %62, %63 : vector<104x128xf32>
    %cst_29 = arith.constant 0.000000e+00 : f32
    %65 = vector.broadcast %cst_29 : f32 to vector<104x128xf32>
    %66 = arith.maximumf %64, %65 : vector<104x128xf32>
    %c0_30 = arith.constant 0 : index
    %c0_31 = arith.constant 0 : index
    %67 = vector.load %arg6[%c0_30, %c0_31] : memref<128x8xf32, #tpu.memory_space<vmem>>, vector<128x8xf32>
    %cst_32 = arith.constant dense<0.000000e+00> : vector<104x8xf32>
    %68 = tpu.matmul %66, %67, %cst_32 {dimension_numbers = #tpu.dot_dimension_numbers<[1], [0], [0], [1], [0, 0, 1, 1], [], []>} : vector<104x128xf32>, vector<128x8xf32>, vector<104x8xf32> -> vector<104x8xf32>
    %c0_33 = arith.constant 0 : index
    %c0_34 = arith.constant 0 : index
    %69 = vector.load %arg7[%c0_33, %c0_34] : memref<8x8xf32, #tpu.memory_space<vmem>>, vector<1x8xf32>
    %70 = vector.broadcast %69 : vector<1x8xf32> to vector<104x8xf32>
    %71 = arith.addf %68, %70 : vector<104x8xf32>
    %c0_35 = arith.constant 0 : index
    %c0_36 = arith.constant 0 : index
    %72 = vector.load %arg8[%c0_35, %c0_36] : memref<104x8xf32, #tpu.memory_space<vmem>>, vector<104x8xf32>
    tpu.vector_store %arg8[%c0_35, %c0_36], %71 {strides = array<i32>} : memref<104x8xf32, #tpu.memory_space<vmem>>, vector<104x8xf32>,
    return
  }
  func.func @transform_0(%arg0: i32) -> (i32, i32) {
    %c0_i32 = arith.constant 0 : i32
    %c0_i32_0 = arith.constant 0 : i32
    return %arg0, %c0_i32 : i32, i32
  }
  func.func @transform_1(%arg0: i32) -> (i32, i32) {
    %c0_i32 = arith.constant 0 : i32
    %c0_i32_0 = arith.constant 0 : i32
    %c0_i32_1 = arith.constant 0 : i32
    return %c0_i32, %c0_i32_0 : i32, i32
  }
  func.func @transform_2(%arg0: i32) -> (i32, i32) {
    %c0_i32 = arith.constant 0 : i32
    %c0_i32_0 = arith.constant 0 : i32
    %c0_i32_1 = arith.constant 0 : i32
    return %c0_i32, %c0_i32_0 : i32, i32
  }
  func.func @transform_3(%arg0: i32) -> (i32, i32) {
    %c0_i32 = arith.constant 0 : i32
    %c0_i32_0 = arith.constant 0 : i32
    %c0_i32_1 = arith.constant 0 : i32
    return %c0_i32, %c0_i32_0 : i32, i32
  }
  func.func @transform_4(%arg0: i32) -> (i32, i32) {
    %c0_i32 = arith.constant 0 : i32
    %c0_i32_0 = arith.constant 0 : i32
    %c0_i32_1 = arith.constant 0 : i32
    return %c0_i32, %c0_i32_0 : i32, i32
  }
  func.func @transform_5(%arg0: i32) -> (i32, i32) {
    %c0_i32 = arith.constant 0 : i32
    %c0_i32_0 = arith.constant 0 : i32
    %c0_i32_1 = arith.constant 0 : i32
    return %c0_i32, %c0_i32_0 : i32, i32
  }
  func.func @transform_6(%arg0: i32) -> (i32, i32) {
    %c0_i32 = arith.constant 0 : i32
    %c0_i32_0 = arith.constant 0 : i32
    %c0_i32_1 = arith.constant 0 : i32
    return %c0_i32, %c0_i32_0 : i32, i32
  }
  func.func @transform_7(%arg0: i32) -> (i32, i32) {
    %c0_i32 = arith.constant 0 : i32
    %c0_i32_0 = arith.constant 0 : i32
    return %arg0, %c0_i32 : i32, i32
  }
}

</mosaic_0001>

<llo_original>
// kernel: network_forward.1
$region0: #{network_forward.1}
  #allocation0 [shape = 'u32[]', space=smem, size = 0x4, offset = 0x4, fixed_abs, tag = 'smem constant byte address 0x4 - core index']
  #allocation1 [shape = 'u32[72,128]{1,0:T(1,128)}', space=vmem, size = 0x9000, scoped, tag = 'internal scratch']
  %s0 = inlined_call_operand.vmem [shape: f32[208,16], index: 0, kind: input, shape index: {}]
  %s1 = inlined_call_operand.vmem [shape: f32[16,128], index: 1, kind: input, shape index: {}]
  %s2 = inlined_call_operand.vmem [shape: f32[8,128], index: 2, kind: input, shape index: {}]
  %s3 = inlined_call_operand.vmem [shape: f32[128,128], index: 3, kind: input, shape index: {}]
  %s4 = inlined_call_operand.vmem [shape: f32[8,128], index: 4, kind: input, shape index: {}]
  %s5 = inlined_call_operand.vmem [shape: f32[128,8], index: 5, kind: input, shape index: {}]
  %s6 = inlined_call_operand.vmem [shape: f32[8,8], index: 6, kind: input, shape index: {}]
  %s7 = inlined_call_operand.vmem [shape: f32[208,8], index: 7, kind: output, shape index: {}]
  %s8 = sld [smem:[#allocation0]]
  $region61: #{network_forward.1} parent=0
    _
  %s10 = ssub.s32 1, %s8
  %s11 = scalar_select 0, %s10, %s8
  loop: start=0, step=1, limit=4
  $region2: #{network_forward.1} parent=0 // loop_pre_header
    _
  $region3: #{network_forward.1} parent=0 // loop_header
    %s13 = sphi 0, %s17
    %p14 = scmp.ge.s32.totalorder %s13, 4
    %s23 = sphi 0, %s25
    %s26 = sphi 0, %s23
    %s27 = sphi 0, %s26
    %s43 = sphi 0, %s27
    %s47 = sphi 0, %s47
    %s49 = sphi 0, %s47
    %s50 = sphi 0, %s49
    %s64 = sphi 0, %s50
    %s68 = sphi 0, %s68
    %s70 = sphi 0, %s68
    %s71 = sphi 0, %s70
    %s85 = sphi 0, %s71
    %s89 = sphi 0, %s89
    %s91 = sphi 0, %s89
    %s92 = sphi 0, %s91
    %s106 = sphi 0, %s92
    %s110 = sphi 0, %s110
    %s112 = sphi 0, %s110
    %s113 = sphi 0, %s112
    %s127 = sphi 0, %s113
    %s131 = sphi 0, %s131
    %s133 = sphi 0, %s131
    %s134 = sphi 0, %s133
    %s148 = sphi 0, %s134
    %s152 = sphi 0, %s152
    %s154 = sphi 0, %s152
    %s155 = sphi 0, %s154
    %s169 = sphi 0, %s155
    %s175 = sphi 0, %s177
    %s178 = sphi 0, %s175
    %s179 = sphi 0, %s178
    %s195 = sphi 0, %s179
  $region4: #{network_forward.1} parent=0 // loop_header_branch
    %16 = sbr.rel (%p14) target = $region8
  $region5: #{network_forward.1} parent=0 // loop_body
    %s18 = ssub.s32 %s13, 1
    %s19 = ssub.s32 %s13, 2
    %s20 = sadd.s32 %s13, 1
    %s21 = ssub.s32 %s13, %s20
    %p22 = scmp.eq.s32.totalorder %s21, 0
    %s24 = sadd.s32 %s23, 1
    %s25 = scalar_select %p22, %s23, %s24
    %p28 = pneg %p22
    %p29 = scmp.eq.s32.totalorder %s13, 1
    %p30 = por %p28, %p29
    %p31 = scmp.ne.s32.totalorder %s23, %s26
    %p32 = scmp.eq.s32.totalorder %s13, 0
    %p33 = por %p31, %p32
    %p34 = scmp.ne.s32.totalorder %s23, %s26
    %p35 = scmp.eq.s32.totalorder %s18, 1
    %p36 = por %p34, %p35
    %p37 = scmp.ne.s32.totalorder %s26, %s27
    %p38 = scmp.eq.s32.totalorder %s18, 0
    %p39 = por %p37, %p38
    %p40 = scmp.ne.s32.totalorder %s26, %s27
    %p41 = scmp.eq.s32.totalorder %s19, 1
    %p42 = por %p40, %p41
    %p44 = scmp.ne.s32.totalorder %s27, %s43
    %p45 = scmp.eq.s32.totalorder %s19, 0
    %p46 = por %p44, %p45
    %s48 = sadd.s32 %s47, 1
    %p51 = scmp.eq.s32.totalorder %s13, 1
    %p52 = scmp.ne.s32.totalorder %s47, %s49
    %p53 = scmp.eq.s32.totalorder %s13, 0
    %p54 = por %p52, %p53
    %p55 = scmp.ne.s32.totalorder %s47, %s49
    %p56 = scmp.eq.s32.totalorder %s18, 1
    %p57 = por %p55, %p56
    %p58 = scmp.ne.s32.totalorder %s49, %s50
    %p59 = scmp.eq.s32.totalorder %s18, 0
    %p60 = por %p58, %p59
    %p61 = scmp.ne.s32.totalorder %s49, %s50
    %p62 = scmp.eq.s32.totalorder %s19, 1
    %p63 = por %p61, %p62
    %p65 = scmp.ne.s32.totalorder %s50, %s64
    %p66 = scmp.eq.s32.totalorder %s19, 0
    %p67 = por %p65, %p66
    %s69 = sadd.s32 %s68, 1
    %p72 = scmp.eq.s32.totalorder %s13, 1
    %p73 = scmp.ne.s32.totalorder %s68, %s70
    %p74 = scmp.eq.s32.totalorder %s13, 0
    %p75 = por %p73, %p74
    %p76 = scmp.ne.s32.totalorder %s68, %s70
    %p77 = scmp.eq.s32.totalorder %s18, 1
    %p78 = por %p76, %p77
    %p79 = scmp.ne.s32.totalorder %s70, %s71
    %p80 = scmp.eq.s32.totalorder %s18, 0
    %p81 = por %p79, %p80
    %p82 = scmp.ne.s32.totalorder %s70, %s71
    %p83 = scmp.eq.s32.totalorder %s19, 1
    %p84 = por %p82, %p83
    %p86 = scmp.ne.s32.totalorder %s71, %s85
    %p87 = scmp.eq.s32.totalorder %s19, 0
    %p88 = por %p86, %p87
    %s90 = sadd.s32 %s89, 1
    %p93 = scmp.eq.s32.totalorder %s13, 1
    %p94 = scmp.ne.s32.totalorder %s89, %s91
    %p95 = scmp.eq.s32.totalorder %s13, 0
    %p96 = por %p94, %p95
    %p97 = scmp.ne.s32.totalorder %s89, %s91
    %p98 = scmp.eq.s32.totalorder %s18, 1
    %p99 = por %p97, %p98
    %p100 = scmp.ne.s32.totalorder %s91, %s92
    %p101 = scmp.eq.s32.totalorder %s18, 0
    %p102 = por %p100, %p101
    %p103 = scmp.ne.s32.totalorder %s91, %s92
    %p104 = scmp.eq.s32.totalorder %s19, 1
    %p105 = por %p103, %p104
    %p107 = scmp.ne.s32.totalorder %s92, %s106
    %p108 = scmp.eq.s32.totalorder %s19, 0
    %p109 = por %p107, %p108
    %s111 = sadd.s32 %s110, 1
    %p114 = scmp.eq.s32.totalorder %s13, 1
    %p115 = scmp.ne.s32.totalorder %s110, %s112
    %p116 = scmp.eq.s32.totalorder %s13, 0
    %p117 = por %p115, %p116
    %p118 = scmp.ne.s32.totalorder %s110, %s112
    %p119 = scmp.eq.s32.totalorder %s18, 1
    %p120 = por %p118, %p119
    %p121 = scmp.ne.s32.totalorder %s112, %s113
    %p122 = scmp.eq.s32.totalorder %s18, 0
    %p123 = por %p121, %p122
    %p124 = scmp.ne.s32.totalorder %s112, %s113
    %p125 = scmp.eq.s32.totalorder %s19, 1
    %p126 = por %p124, %p125
    %p128 = scmp.ne.s32.totalorder %s113, %s127
    %p129 = scmp.eq.s32.totalorder %s19, 0
    %p130 = por %p128, %p129
    %s132 = sadd.s32 %s131, 1
    %p135 = scmp.eq.s32.totalorder %s13, 1
    %p136 = scmp.ne.s32.totalorder %s131, %s133
    %p137 = scmp.eq.s32.totalorder %s13, 0
    %p138 = por %p136, %p137
    %p139 = scmp.ne.s32.totalorder %s131, %s133
    %p140 = scmp.eq.s32.totalorder %s18, 1
    %p141 = por %p139, %p140
    %p142 = scmp.ne.s32.totalorder %s133, %s134
    %p143 = scmp.eq.s32.totalorder %s18, 0
    %p144 = por %p142, %p143
    %p145 = scmp.ne.s32.totalorder %s133, %s134
    %p146 = scmp.eq.s32.totalorder %s19, 1
    %p147 = por %p145, %p146
    %p149 = scmp.ne.s32.totalorder %s134, %s148
    %p150 = scmp.eq.s32.totalorder %s19, 0
    %p151 = por %p149, %p150
    %s153 = sadd.s32 %s152, 1
    %p156 = scmp.eq.s32.totalorder %s13, 1
    %p157 = scmp.ne.s32.totalorder %s152, %s154
    %p158 = scmp.eq.s32.totalorder %s13, 0
    %p159 = por %p157, %p158
    %p160 = scmp.ne.s32.totalorder %s152, %s154
    %p161 = scmp.eq.s32.totalorder %s18, 1
    %p162 = por %p160, %p161
    %p163 = scmp.ne.s32.totalorder %s154, %s155
    %p164 = scmp.eq.s32.totalorder %s18, 0
    %p165 = por %p163, %p164
    %p166 = scmp.ne.s32.totalorder %s154, %s155
    %p167 = scmp.eq.s32.totalorder %s19, 1
    %p168 = por %p166, %p167
    %p170 = scmp.ne.s32.totalorder %s155, %s169
    %p171 = scmp.eq.s32.totalorder %s19, 0
    %p172 = por %p170, %p171
    %s173 = ssub.s32 %s13, %s20
    %p174 = scmp.eq.s32.totalorder %s173, 0
    %s176 = sadd.s32 %s175, 1
    %s177 = scalar_select %p174, %s175, %s176
    %p180 = pneg %p174
    %p181 = scmp.eq.s32.totalorder %s13, 1
    %p182 = por %p180, %p181
    %p183 = scmp.ne.s32.totalorder %s175, %s178
    %p184 = scmp.eq.s32.totalorder %s13, 0
    %p185 = por %p183, %p184
    %p186 = scmp.ne.s32.totalorder %s175, %s178
    %p187 = scmp.eq.s32.totalorder %s18, 1
    %p188 = por %p186, %p187
    %p189 = scmp.ne.s32.totalorder %s178, %s179
    %p190 = scmp.eq.s32.totalorder %s18, 0
    %p191 = por %p189, %p190
    %p192 = scmp.ne.s32.totalorder %s178, %s179
    %p193 = scmp.eq.s32.totalorder %s19, 1
    %p194 = por %p192, %p193
    %p196 = scmp.ne.s32.totalorder %s179, %s195
    %p197 = scmp.eq.s32.totalorder %s19, 0
    %p198 = por %p196, %p197
    %p199 = scmp.le.s32.totalorder 1, %s13
    %p200 = scmp.lt.s32.totalorder %s13, 3
    %p201 = pnand %p199, %p200
    %p202 = pneg %p201
    // Predicated region
    $region9: #{network_forward.1} parent=5 // pred_check
      _
    $region10: #{network_forward.1} parent=5 // pred_check_branch
      %204 = sbr.rel (%p201) target = $region12
    $region11: #{network_forward.1} parent=5 // pred_region
      %s205 = ssub.s32 %s13, 1
      // Predicated region
      $region13: #{network_forward.1} parent=11 // pred_check
        %p206 = pneg %p60
      $region14: #{network_forward.1} parent=11 // pred_check_branch
        %208 = sbr.rel (%p206) target = $region16
      $region15: #{network_forward.1} parent=11 // pred_region
        _
      $region16: #{network_forward.1} parent=11 // pred_fallthru
        _
      // Predicated region
      $region17: #{network_forward.1} parent=11 // pred_check
        %p209 = pneg %p81
      $region18: #{network_forward.1} parent=11 // pred_check_branch
        %211 = sbr.rel (%p209) target = $region20
      $region19: #{network_forward.1} parent=11 // pred_region
        _
      $region20: #{network_forward.1} parent=11 // pred_fallthru
        _
      // Predicated region
      $region21: #{network_forward.1} parent=11 // pred_check
        %p212 = pneg %p102
      $region22: #{network_forward.1} parent=11 // pred_check_branch
        %214 = sbr.rel (%p212) target = $region24
      $region23: #{network_forward.1} parent=11 // pred_region
        _
      $region24: #{network_forward.1} parent=11 // pred_fallthru
        _
      // Predicated region
      $region25: #{network_forward.1} parent=11 // pred_check
        %p215 = pneg %p123
      $region26: #{network_forward.1} parent=11 // pred_check_branch
        %217 = sbr.rel (%p215) target = $region28
      $region27: #{network_forward.1} parent=11 // pred_region
        _
      $region28: #{network_forward.1} parent=11 // pred_fallthru
        _
      // Predicated region
      $region29: #{network_forward.1} parent=11 // pred_check
        %p218 = pneg %p144
      $region30: #{network_forward.1} parent=11 // pred_check_branch
        %220 = sbr.rel (%p218) target = $region32
      $region31: #{network_forward.1} parent=11 // pred_region
        _
      $region32: #{network_forward.1} parent=11 // pred_fallthru
        _
      // Predicated region
      $region33: #{network_forward.1} parent=11 // pred_check
        %p221 = pneg %p165
      $region34: #{network_forward.1} parent=11 // pred_check_branch
        %223 = sbr.rel (%p221) target = $region36
      $region35: #{network_forward.1} parent=11 // pred_region
        _
      $region36: #{network_forward.1} parent=11 // pred_fallthru
        _
    $region12: #{network_forward.1} parent=5 // pred_fallthru
      _
    %p224 = scmp.lt.s32.totalorder %s13, 2
    // Predicated region
    $region37: #{network_forward.1} parent=5 // pred_check
      %p225 = pneg %p224
    $region38: #{network_forward.1} parent=5 // pred_check_branch
      %227 = sbr.rel (%p225) target = $region40
    $region39: #{network_forward.1} parent=5 // pred_region
      // Predicated region
      $region41: #{network_forward.1} parent=39 // pred_check
        %p228 = pneg %p33
      $region42: #{network_forward.1} parent=39 // pred_check_branch
        %230 = sbr.rel (%p228) target = $region44
      $region43: #{network_forward.1} parent=39 // pred_region
        %s231 = smul.u32 13, %s13
        %p232 = scmp.lt.s32.totalorder %s231, 25
        %s233 = scalar_select %p232, %s231, 25
        %s234 = smul.addr %s233, 8
        %s235 = scalar_lea.vmem %s0, %s234
        %s236 = smul.u32 13, %s13
      $region44: #{network_forward.1} parent=39 // pred_fallthru
        _
    $region40: #{network_forward.1} parent=5 // pred_fallthru
      _
    %p237 = scmp.le.s32.totalorder 1, %s13
    %p238 = scmp.lt.s32.totalorder %s13, 3
    %p239 = pnand %p237, %p238
    %p240 = pneg %p239
    // Predicated region
    $region45: #{network_forward.1} parent=5 // pred_check
      _
    $region46: #{network_forward.1} parent=5 // pred_check_branch
      %242 = sbr.rel (%p239) target = $region48
    $region47: #{network_forward.1} parent=5 // pred_region
      %s243 = ssub.s32 %s13, 1
      %s244 = smul.u32 13, %s18
      %p245 = scmp.lt.s32.totalorder %s244, 25
      %s246 = scalar_select %p245, %s244, 25
      %s247 = smul.addr %s246, 8
      %s248 = scalar_lea.vmem %s0, %s247
      %p249 = pneg %p39
      %p250 = pneg %p36
      %p251 = pneg %p60
      %p252 = pneg %p57
      %p253 = pneg %p81
      %p254 = pneg %p78
      %p255 = pneg %p102
      %p256 = pneg %p99
      %p257 = pneg %p123
      %p258 = pneg %p120
      %p259 = pneg %p144
      %p260 = pneg %p141
      %p261 = pneg %p165
      %p262 = pneg %p162
      %p263 = pneg %p191
      %p264 = pneg %p188
      %s265 = smul.u32 13, %s18
      %p266 = scmp.lt.s32.totalorder %s265, 25
      %s267 = scalar_select %p266, %s265, 25
      %s268 = smul.addr %s267, 8
      %s269 = scalar_lea.vmem %s7, %s268
      %s270 = smul.u32 13, %s18
      %p271 = scmp.lt.s32.totalorder %s270, 25
      %s272 = scalar_select %p271, %s270, 25
      %s273 = smul.addr %s272, 8
      %s274 = scalar_lea.vmem %s0, %s273
      %s275 = smul.u32 13, %s18
      %s276 = smul.u32 13, %s18
      %p277 = scmp.lt.s32.totalorder %s276, 25
      %s278 = scalar_select %p277, %s276, 25
      %s279 = smul.addr %s278, 8
      %s280 = scalar_lea.vmem %s7, %s279
      %s281 = smul.u32 13, %s18
      %v282 = vld [vmem:[%s274] sm:$0xff]
      %v283 = vld [vmem:[%s274 + $0x8] sm:$0xff]
      %v284 = vld [vmem:[%s274 + $0x10] sm:$0xff]
      %v285 = vld [vmem:[%s274 + $0x18] sm:$0xff]
      %v286 = vld [vmem:[%s274 + $0x20] sm:$0xff]
      %v287 = vld [vmem:[%s274 + $0x28] sm:$0xff]
      %v288 = vld [vmem:[%s274 + $0x30] sm:$0xff]
      %v289 = vld [vmem:[%s274 + $0x38] sm:$0xff]
      %v290 = vld [vmem:[%s274 + $0x40] sm:$0xff]
      %v291 = vld [vmem:[%s274 + $0x48] sm:$0xff]
      %v292 = vld [vmem:[%s274 + $0x50] sm:$0xff]
      %v293 = vld [vmem:[%s274 + $0x58] sm:$0xff]
      %v294 = vld [vmem:[%s274 + $0x60] sm:$0xff]
      %v295 = vld [vmem:[%s1] sm:$0xff]
      %v296 = vld [vmem:[%s1 + $0x8] sm:$0xff]
      %v297 = vld [vmem:[%s2] sm:$0x1]
      %v298 = vperm.slane %v297, 0
      %vm299 = vcmask 130048
      %v301 = vsel %vm299, %v282, 0
      %v304 = vsel %vm299, %v283, 0
      %v307 = vsel %vm299, %v284, 0
      %v310 = vsel %vm299, %v285, 0
      %v313 = vsel %vm299, %v286, 0
      %v316 = vsel %vm299, %v287, 0
      %v319 = vsel %vm299, %v288, 0
      %v322 = vsel %vm299, %v289, 0
      %v325 = vsel %vm299, %v290, 0
      %v328 = vsel %vm299, %v291, 0
      %v331 = vsel %vm299, %v292, 0
      %v334 = vsel %vm299, %v293, 0
      %v337 = vsel %vm299, %v294, 0
      %339 = vmatpush.msra.mxu0 0.0
      %340 = vmatpush.msra.mxu0 0.0
      %341 = vmatpush.msra.mxu0 0.0
      %342 = vmatpush.msra.mxu0 0.0
      %343 = vmatpush.msra.mxu0 0.0
      %344 = vmatpush.msra.mxu0 0.0
      %345 = vmatpush.msra.mxu0 0.0
      %346 = vmatpush.msra.mxu0 0.0
      %347 = vmatpush.msra.mxu0 0.0
      %348 = vmatpush.msra.mxu0 0.0
      %349 = vmatpush.msra.mxu0 0.0
      %350 = vmatpush.msra.mxu0 0.0
      %351 = vmatpush.msra.mxu0 0.0
      %352 = vmatpush.msra.mxu0 0.0
      %353 = vmatpush.msra.mxu0 %v296
      %354 = vmatpush.msra.mxu0 %v295
      %355 = vmatmul.f32.gmra.mxu0 %v301
      %v356 = vpop.f32.mrf.mxu0
      %v357 = vadd.f32 %v298, %v356
      %358 = vmatmul.f32.gmra.mxu0 %v304
      %v359 = vpop.f32.mrf.mxu0
      %v360 = vadd.f32 %v298, %v359
      %361 = vmatmul.f32.gmra.mxu0 %v307
      %v362 = vpop.f32.mrf.mxu0
      %v363 = vadd.f32 %v298, %v362
      %364 = vmatmul.f32.gmra.mxu0 %v310
      %v365 = vpop.f32.mrf.mxu0
      %v366 = vadd.f32 %v298, %v365
      %367 = vmatmul.f32.gmra.mxu0 %v313
      %v368 = vpop.f32.mrf.mxu0
      %v369 = vadd.f32 %v298, %v368
      %370 = vmatmul.f32.gmra.mxu0 %v316
      %v371 = vpop.f32.mrf.mxu0
      %v372 = vadd.f32 %v298, %v371
      %373 = vmatmul.f32.gmra.mxu0 %v319
      %v374 = vpop.f32.mrf.mxu0
      %v375 = vadd.f32 %v298, %v374
      %376 = vmatmul.f32.gmra.mxu0 %v322
      %v377 = vpop.f32.mrf.mxu0
      %v378 = vadd.f32 %v298, %v377
      %379 = vmatmul.f32.gmra.mxu0 %v325
      %v380 = vpop.f32.mrf.mxu0
      %v381 = vadd.f32 %v298, %v380
      %382 = vmatmul.f32.gmra.mxu0 %v328
      %v383 = vpop.f32.mrf.mxu0
      %v384 = vadd.f32 %v298, %v383
      %385 = vmatmul.f32.gmra.mxu0 %v331
      %v386 = vpop.f32.mrf.mxu0
      %v387 = vadd.f32 %v298, %v386
      %388 = vmatmul.f32.gmra.mxu0 %v334
      %v389 = vpop.f32.mrf.mxu0
      %v390 = vadd.f32 %v298, %v389
      %391 = vmatmul.f32.gmra.mxu0 %v337
      %v392 = vpop.f32.mrf.mxu0
      %v393 = vadd.f32 %v298, %v392
      %394 = vdwg.mxu0
      %v395 = vld [vmem:[%s2 + $0x1] sm:$0x1]
      %v396 = vld [vmem:[%s2 + $0x2] sm:$0x1]
      %397 = vadd.xlane.f32.xlu0 %v357
      %v398 = vpop.xlane.xlu0 %397
      %399 = vadd.xlane.f32.xlu0 %v360
      %v400 = vpop.xlane.xlu0 %399
      %401 = vadd.xlane.f32.xlu0 %v363
      %v402 = vpop.xlane.xlu0 %401
      %403 = vadd.xlane.f32.xlu0 %v366
      %v404 = vpop.xlane.xlu0 %403
      %405 = vadd.xlane.f32.xlu0 %v369
      %v406 = vpop.xlane.xlu0 %405
      %407 = vadd.xlane.f32.xlu0 %v372
      %v408 = vpop.xlane.xlu0 %407
      %409 = vadd.xlane.f32.xlu0 %v375
      %v410 = vpop.xlane.xlu0 %409
      %411 = vadd.xlane.f32.xlu0 %v378
      %v412 = vpop.xlane.xlu0 %411
      %413 = vadd.xlane.f32.xlu0 %v381
      %v414 = vpop.xlane.xlu0 %413
      %415 = vadd.xlane.f32.xlu0 %v384
      %v416 = vpop.xlane.xlu0 %415
      %417 = vadd.xlane.f32.xlu0 %v387
      %v418 = vpop.xlane.xlu0 %417
      %419 = vadd.xlane.f32.xlu0 %v390
      %v420 = vpop.xlane.xlu0 %419
      %421 = vadd.xlane.f32.xlu0 %v393
      %v422 = vpop.xlane.xlu0 %421
      %v423 = vmul.f32 %v357, %v357
      %v424 = vmul.f32 %v360, %v360
      %v425 = vmul.f32 %v363, %v363
      %v426 = vmul.f32 %v366, %v366
      %v427 = vmul.f32 %v369, %v369
      %v428 = vmul.f32 %v372, %v372
      %v429 = vmul.f32 %v375, %v375
      %v430 = vmul.f32 %v378, %v378
      %v431 = vmul.f32 %v381, %v381
      %v432 = vmul.f32 %v384, %v384
      %v433 = vmul.f32 %v387, %v387
      %v434 = vmul.f32 %v390, %v390
      %v435 = vmul.f32 %v393, %v393
      %436 = vadd.xlane.f32.xlu0 %v423
      %v437 = vpop.xlane.xlu0 %436
      %438 = vadd.xlane.f32.xlu0 %v424
      %v439 = vpop.xlane.xlu0 %438
      %440 = vadd.xlane.f32.xlu0 %v425
      %v441 = vpop.xlane.xlu0 %440
      %442 = vadd.xlane.f32.xlu0 %v426
      %v443 = vpop.xlane.xlu0 %442
      %444 = vadd.xlane.f32.xlu0 %v427
      %v445 = vpop.xlane.xlu0 %444
      %446 = vadd.xlane.f32.xlu0 %v428
      %v447 = vpop.xlane.xlu0 %446
      %448 = vadd.xlane.f32.xlu0 %v429
      %v449 = vpop.xlane.xlu0 %448
      %450 = vadd.xlane.f32.xlu0 %v430
      %v451 = vpop.xlane.xlu0 %450
      %452 = vadd.xlane.f32.xlu0 %v431
      %v453 = vpop.xlane.xlu0 %452
      %454 = vadd.xlane.f32.xlu0 %v432
      %v455 = vpop.xlane.xlu0 %454
      %456 = vadd.xlane.f32.xlu0 %v433
      %v457 = vpop.xlane.xlu0 %456
      %458 = vadd.xlane.f32.xlu0 %v434
      %v459 = vpop.xlane.xlu0 %458
      %460 = vadd.xlane.f32.xlu0 %v435
      %v461 = vpop.xlane.xlu0 %460
      %v462 = vmul.f32 %v398, 0.03125
      %v463 = vmul.f32 %v400, 0.03125
      %v464 = vmul.f32 %v402, 0.03125
      %v465 = vmul.f32 %v404, 0.03125
      %v466 = vmul.f32 %v406, 0.03125
      %v467 = vmul.f32 %v408, 0.03125
      %v468 = vmul.f32 %v410, 0.03125
      %v469 = vmul.f32 %v412, 0.03125
      %v470 = vmul.f32 %v414, 0.03125
      %v471 = vmul.f32 %v416, 0.03125
      %v472 = vmul.f32 %v418, 0.03125
      %v473 = vmul.f32 %v420, 0.03125
      %v474 = vmul.f32 %v422, 0.03125
      %v475 = vmul.f32 %v437, 0.03125
      %v476 = vmul.f32 %v439, 0.03125
      %v477 = vmul.f32 %v441, 0.03125
      %v478 = vmul.f32 %v443, 0.03125
      %v479 = vmul.f32 %v445, 0.03125
      %v480 = vmul.f32 %v447, 0.03125
      %v481 = vmul.f32 %v449, 0.03125
      %v482 = vmul.f32 %v451, 0.03125
      %v483 = vmul.f32 %v453, 0.03125
      %v484 = vmul.f32 %v455, 0.03125
      %v485 = vmul.f32 %v457, 0.03125
      %v486 = vmul.f32 %v459, 0.03125
      %v487 = vmul.f32 %v461, 0.03125
      %v488 = vmul.f32 %v462, %v462
      %v489 = vmul.f32 %v463, %v463
      %v490 = vmul.f32 %v464, %v464
      %v491 = vmul.f32 %v465, %v465
      %v492 = vmul.f32 %v466, %v466
      %v493 = vmul.f32 %v467, %v467
      %v494 = vmul.f32 %v468, %v468
      %v495 = vmul.f32 %v469, %v469
      %v496 = vmul.f32 %v470, %v470
      %v497 = vmul.f32 %v471, %v471
      %v498 = vmul.f32 %v472, %v472
      %v499 = vmul.f32 %v473, %v473
      %v500 = vmul.f32 %v474, %v474
      %v501 = vsub.f32 %v475, %v488
      %v502 = vsub.f32 %v476, %v489
      %v503 = vsub.f32 %v477, %v490
      %v504 = vsub.f32 %v478, %v491
      %v505 = vsub.f32 %v479, %v492
      %v506 = vsub.f32 %v480, %v493
      %v507 = vsub.f32 %v481, %v494
      %v508 = vsub.f32 %v482, %v495
      %v509 = vsub.f32 %v483, %v496
      %v510 = vsub.f32 %v484, %v497
      %v511 = vsub.f32 %v485, %v498
      %v512 = vsub.f32 %v486, %v499
      %v513 = vsub.f32 %v487, %v500
      %v514 = vmax.f32 %v501, 0.0
      %v515 = vmax.f32 %v502, 0.0
      %v516 = vmax.f32 %v503, 0.0
      %v517 = vmax.f32 %v504, 0.0
      %v518 = vmax.f32 %v505, 0.0
      %v519 = vmax.f32 %v506, 0.0
      %v520 = vmax.f32 %v507, 0.0
      %v521 = vmax.f32 %v508, 0.0
      %v522 = vmax.f32 %v509, 0.0
      %v523 = vmax.f32 %v510, 0.0
      %v524 = vmax.f32 %v511, 0.0
      %v525 = vmax.f32 %v512, 0.0
      %v526 = vmax.f32 %v513, 0.0
      %v527 = vsub.f32 %v357, %v462
      %v528 = vsub.f32 %v360, %v463
      %v529 = vsub.f32 %v363, %v464
      %v530 = vsub.f32 %v366, %v465
      %v531 = vsub.f32 %v369, %v466
      %v532 = vsub.f32 %v372, %v467
      %v533 = vsub.f32 %v375, %v468
      %v534 = vsub.f32 %v378, %v469
      %v535 = vsub.f32 %v381, %v470
      %v536 = vsub.f32 %v384, %v471
      %v537 = vsub.f32 %v387, %v472
      %v538 = vsub.f32 %v390, %v473
      %v539 = vsub.f32 %v393, %v474
      %v540 = vadd.f32 %v514, 1e-05
      %v541 = vadd.f32 %v515, 1e-05
      %v542 = vadd.f32 %v516, 1e-05
      %v543 = vadd.f32 %v517, 1e-05
      %v544 = vadd.f32 %v518, 1e-05
      %v545 = vadd.f32 %v519, 1e-05
      %v546 = vadd.f32 %v520, 1e-05
      %v547 = vadd.f32 %v521, 1e-05
      %v548 = vadd.f32 %v522, 1e-05
      %v549 = vadd.f32 %v523, 1e-05
      %v550 = vadd.f32 %v524, 1e-05
      %v551 = vadd.f32 %v525, 1e-05
      %v552 = vadd.f32 %v526, 1e-05
      %v553 = vrsqrt.pop %v540
      %v554 = vmul.f32 %v553, %v540
      %v555 = vmul.f32 %v554, %v553
      %v556 = vmul.f32 0.5, %v555
      %v557 = vsub.f32 1.5, %v556
      %v558 = vmul.f32 %v553, %v557
      %vm559 = vweird.f32 %v540
      %vm560 = vweird.f32 %v553
      %vm561 = vmor %vm559, %vm560
      %v562 = vsel %vm561, %v553, %v558
      %v563 = vrsqrt.pop %v541
      %v564 = vmul.f32 %v563, %v541
      %v565 = vmul.f32 %v564, %v563
      %v566 = vmul.f32 0.5, %v565
      %v567 = vsub.f32 1.5, %v566
      %v568 = vmul.f32 %v563, %v567
      %vm569 = vweird.f32 %v541
      %vm570 = vweird.f32 %v563
      %vm571 = vmor %vm569, %vm570
      %v572 = vsel %vm571, %v563, %v568
      %v573 = vrsqrt.pop %v542
      %v574 = vmul.f32 %v573, %v542
      %v575 = vmul.f32 %v574, %v573
      %v576 = vmul.f32 0.5, %v575
      %v577 = vsub.f32 1.5, %v576
      %v578 = vmul.f32 %v573, %v577
      %vm579 = vweird.f32 %v542
      %vm580 = vweird.f32 %v573
      %vm581 = vmor %vm579, %vm580
      %v582 = vsel %vm581, %v573, %v578
      %v583 = vrsqrt.pop %v543
      %v584 = vmul.f32 %v583, %v543
      %v585 = vmul.f32 %v584, %v583
      %v586 = vmul.f32 0.5, %v585
      %v587 = vsub.f32 1.5, %v586
      %v588 = vmul.f32 %v583, %v587
      %vm589 = vweird.f32 %v543
      %vm590 = vweird.f32 %v583
      %vm591 = vmor %vm589, %vm590
      %v592 = vsel %vm591, %v583, %v588
      %v593 = vrsqrt.pop %v544
      %v594 = vmul.f32 %v593, %v544
      %v595 = vmul.f32 %v594, %v593
      %v596 = vmul.f32 0.5, %v595
      %v597 = vsub.f32 1.5, %v596
      %v598 = vmul.f32 %v593, %v597
      %vm599 = vweird.f32 %v544
      %vm600 = vweird.f32 %v593
      %vm601 = vmor %vm599, %vm600
      %v602 = vsel %vm601, %v593, %v598
      %v603 = vrsqrt.pop %v545
      %v604 = vmul.f32 %v603, %v545
      %v605 = vmul.f32 %v604, %v603
      %v606 = vmul.f32 0.5, %v605
      %v607 = vsub.f32 1.5, %v606
      %v608 = vmul.f32 %v603, %v607
      %vm609 = vweird.f32 %v545
      %vm610 = vweird.f32 %v603
      %vm611 = vmor %vm609, %vm610
      %v612 = vsel %vm611, %v603, %v608
      %v613 = vrsqrt.pop %v546
      %v614 = vmul.f32 %v613, %v546
      %v615 = vmul.f32 %v614, %v613
      %v616 = vmul.f32 0.5, %v615
      %v617 = vsub.f32 1.5, %v616
      %v618 = vmul.f32 %v613, %v617
      %vm619 = vweird.f32 %v546
      %vm620 = vweird.f32 %v613
      %vm621 = vmor %vm619, %vm620
      %v622 = vsel %vm621, %v613, %v618
      %v623 = vrsqrt.pop %v547
      %v624 = vmul.f32 %v623, %v547
      %v625 = vmul.f32 %v624, %v623
      %v626 = vmul.f32 0.5, %v625
      %v627 = vsub.f32 1.5, %v626
      %v628 = vmul.f32 %v623, %v627
      %vm629 = vweird.f32 %v547
      %vm630 = vweird.f32 %v623
      %vm631 = vmor %vm629, %vm630
      %v632 = vsel %vm631, %v623, %v628
      %v633 = vrsqrt.pop %v548
      %v634 = vmul.f32 %v633, %v548
      %v635 = vmul.f32 %v634, %v633
      %v636 = vmul.f32 0.5, %v635
      %v637 = vsub.f32 1.5, %v636
      %v638 = vmul.f32 %v633, %v637
      %vm639 = vweird.f32 %v548
      %vm640 = vweird.f32 %v633
      %vm641 = vmor %vm639, %vm640
      %v642 = vsel %vm641, %v633, %v638
      %v643 = vrsqrt.pop %v549
      %v644 = vmul.f32 %v643, %v549
      %v645 = vmul.f32 %v644, %v643
      %v646 = vmul.f32 0.5, %v645
      %v647 = vsub.f32 1.5, %v646
      %v648 = vmul.f32 %v643, %v647
      %vm649 = vweird.f32 %v549
      %vm650 = vweird.f32 %v643
      %vm651 = vmor %vm649, %vm650
      %v652 = vsel %vm651, %v643, %v648
      %v653 = vrsqrt.pop %v550
      %v654 = vmul.f32 %v653, %v550
      %v655 = vmul.f32 %v654, %v653
      %v656 = vmul.f32 0.5, %v655
      %v657 = vsub.f32 1.5, %v656
      %v658 = vmul.f32 %v653, %v657
      %vm659 = vweird.f32 %v550
      %vm660 = vweird.f32 %v653
      %vm661 = vmor %vm659, %vm660
      %v662 = vsel %vm661, %v653, %v658
      %v663 = vrsqrt.pop %v551
      %v664 = vmul.f32 %v663, %v551
      %v665 = vmul.f32 %v664, %v663
      %v666 = vmul.f32 0.5, %v665
      %v667 = vsub.f32 1.5, %v666
      %v668 = vmul.f32 %v663, %v667
      %vm669 = vweird.f32 %v551
      %vm670 = vweird.f32 %v663
      %vm671 = vmor %vm669, %vm670
      %v672 = vsel %vm671, %v663, %v668
      %v673 = vrsqrt.pop %v552
      %v674 = vmul.f32 %v673, %v552
      %v675 = vmul.f32 %v674, %v673
      %v676 = vmul.f32 0.5, %v675
      %v677 = vsub.f32 1.5, %v676
      %v678 = vmul.f32 %v673, %v677
      %vm679 = vweird.f32 %v552
      %vm680 = vweird.f32 %v673
      %vm681 = vmor %vm679, %vm680
      %v682 = vsel %vm681, %v673, %v678
      %v683 = vmul.f32 %v527, %v562
      %v684 = vmul.f32 %v528, %v572
      %v685 = vmul.f32 %v529, %v582
      %v686 = vmul.f32 %v530, %v592
      %v687 = vmul.f32 %v531, %v602
      %v688 = vmul.f32 %v532, %v612
      %v689 = vmul.f32 %v533, %v622
      %v690 = vmul.f32 %v534, %v632
      %v691 = vmul.f32 %v535, %v642
      %v692 = vmul.f32 %v536, %v652
      %v693 = vmul.f32 %v537, %v662
      %v694 = vmul.f32 %v538, %v672
      %v695 = vmul.f32 %v539, %v682
      %v696 = vperm.slane %v395, 0
      %v697 = vmul.f32 %v683, %v696
      %v698 = vmul.f32 %v684, %v696
      %v699 = vmul.f32 %v685, %v696
      %v700 = vmul.f32 %v686, %v696
      %v701 = vmul.f32 %v687, %v696
      %v702 = vmul.f32 %v688, %v696
      %v703 = vmul.f32 %v689, %v696
      %v704 = vmul.f32 %v690, %v696
      %v705 = vmul.f32 %v691, %v696
      %v706 = vmul.f32 %v692, %v696
      %v707 = vmul.f32 %v693, %v696
      %v708 = vmul.f32 %v694, %v696
      %v709 = vmul.f32 %v695, %v696
      %v710 = vperm.slane %v396, 0
      %v711 = vadd.f32 %v697, %v710
      %v712 = vadd.f32 %v698, %v710
      %v713 = vadd.f32 %v699, %v710
      %v714 = vadd.f32 %v700, %v710
      %v715 = vadd.f32 %v701, %v710
      %v716 = vadd.f32 %v702, %v710
      %v717 = vadd.f32 %v703, %v710
      %v718 = vadd.f32 %v704, %v710
      %v719 = vadd.f32 %v705, %v710
      %v720 = vadd.f32 %v706, %v710
      %v721 = vadd.f32 %v707, %v710
      %v722 = vadd.f32 %v708, %v710
      %v723 = vadd.f32 %v709, %v710
      %v724 = vmax.f32 %v711, 0.0
      %v725 = vmax.f32 %v712, 0.0
      %v726 = vmax.f32 %v713, 0.0
      %v727 = vmax.f32 %v714, 0.0
      %v728 = vmax.f32 %v715, 0.0
      %v729 = vmax.f32 %v716, 0.0
      %v730 = vmax.f32 %v717, 0.0
      %v731 = vmax.f32 %v718, 0.0
      %v732 = vmax.f32 %v719, 0.0
      %v733 = vmax.f32 %v720, 0.0
      %v734 = vmax.f32 %v721, 0.0
      %v735 = vmax.f32 %v722, 0.0
      %v736 = vmax.f32 %v723, 0.0
      %v737 = vld [vmem:[%s3] sm:$0xff]
      %v738 = vld [vmem:[%s3 + $0x8] sm:$0xff]
      %v739 = vld [vmem:[%s3 + $0x10] sm:$0xff]
      %v740 = vld [vmem:[%s3 + $0x18] sm:$0xff]
      %v741 = vld [vmem:[%s3 + $0x20] sm:$0xff]
      %v742 = vld [vmem:[%s3 + $0x28] sm:$0xff]
      %v743 = vld [vmem:[%s3 + $0x30] sm:$0xff]
      %v744 = vld [vmem:[%s3 + $0x38] sm:$0xff]
      %v745 = vld [vmem:[%s3 + $0x40] sm:$0xff]
      %v746 = vld [vmem:[%s3 + $0x48] sm:$0xff]
      %v747 = vld [vmem:[%s3 + $0x50] sm:$0xff]
      %v748 = vld [vmem:[%s3 + $0x58] sm:$0xff]
      %v749 = vld [vmem:[%s3 + $0x60] sm:$0xff]
      %v750 = vld [vmem:[%s3 + $0x68] sm:$0xff]
      %v751 = vld [vmem:[%s3 + $0x70] sm:$0xff]
      %v752 = vld [vmem:[%s3 + $0x78] sm:$0xff]
      %v753 = vld [vmem:[%s4] sm:$0x1]
      %v754 = vperm.slane %v753, 0
      %755 = vmatpush.msra.mxu0 %v752
      %756 = vmatpush.msra.mxu0 %v751
      %757 = vmatpush.msra.mxu0 %v750
      %758 = vmatpush.msra.mxu0 %v749
      %759 = vmatpush.msra.mxu0 %v748
      %760 = vmatpush.msra.mxu0 %v747
      %761 = vmatpush.msra.mxu0 %v746
      %762 = vmatpush.msra.mxu0 %v745
      %763 = vmatpush.msra.mxu0 %v744
      %764 = vmatpush.msra.mxu0 %v743
      %765 = vmatpush.msra.mxu0 %v742
      %766 = vmatpush.msra.mxu0 %v741
      %767 = vmatpush.msra.mxu0 %v740
      %768 = vmatpush.msra.mxu0 %v739
      %769 = vmatpush.msra.mxu0 %v738
      %770 = vmatpush.msra.mxu0 %v737
      %771 = vmatmul.f32.gmra.mxu0 %v724
      %v772 = vpop.f32.mrf.mxu0
      %v773 = vadd.f32 %v754, %v772
      %774 = vmatmul.f32.gmra.mxu0 %v725
      %v775 = vpop.f32.mrf.mxu0
      %v776 = vadd.f32 %v754, %v775
      %777 = vmatmul.f32.gmra.mxu0 %v726
      %v778 = vpop.f32.mrf.mxu0
      %v779 = vadd.f32 %v754, %v778
      %780 = vmatmul.f32.gmra.mxu0 %v727
      %v781 = vpop.f32.mrf.mxu0
      %v782 = vadd.f32 %v754, %v781
      %783 = vmatmul.f32.gmra.mxu0 %v728
      %v784 = vpop.f32.mrf.mxu0
      %v785 = vadd.f32 %v754, %v784
      %786 = vmatmul.f32.gmra.mxu0 %v729
      %v787 = vpop.f32.mrf.mxu0
      %v788 = vadd.f32 %v754, %v787
      %789 = vmatmul.f32.gmra.mxu0 %v730
      %v790 = vpop.f32.mrf.mxu0
      %v791 = vadd.f32 %v754, %v790
      %792 = vmatmul.f32.gmra.mxu0 %v731
      %v793 = vpop.f32.mrf.mxu0
      %v794 = vadd.f32 %v754, %v793
      %795 = vmatmul.f32.gmra.mxu0 %v732
      %v796 = vpop.f32.mrf.mxu0
      %v797 = vadd.f32 %v754, %v796
      %798 = vmatmul.f32.gmra.mxu0 %v733
      %v799 = vpop.f32.mrf.mxu0
      %v800 = vadd.f32 %v754, %v799
      %801 = vmatmul.f32.gmra.mxu0 %v734
      %v802 = vpop.f32.mrf.mxu0
      %v803 = vadd.f32 %v754, %v802
      %804 = vmatmul.f32.gmra.mxu0 %v735
      %v805 = vpop.f32.mrf.mxu0
      %v806 = vadd.f32 %v754, %v805
      %807 = vmatmul.f32.gmra.mxu0 %v736
      %v808 = vpop.f32.mrf.mxu0
      %v809 = vadd.f32 %v754, %v808
      %810 = vdwg.mxu0
      %v811 = vld [vmem:[%s4 + $0x1] sm:$0x1]
      %v812 = vld [vmem:[%s4 + $0x2] sm:$0x1]
      %813 = vadd.xlane.f32.xlu0 %v773
      %v814 = vpop.xlane.xlu0 %813
      %815 = vadd.xlane.f32.xlu0 %v776
      %v816 = vpop.xlane.xlu0 %815
      %817 = vadd.xlane.f32.xlu0 %v779
      %v818 = vpop.xlane.xlu0 %817
      %819 = vadd.xlane.f32.xlu0 %v782
      %v820 = vpop.xlane.xlu0 %819
      %821 = vadd.xlane.f32.xlu0 %v785
      %v822 = vpop.xlane.xlu0 %821
      %823 = vadd.xlane.f32.xlu0 %v788
      %v824 = vpop.xlane.xlu0 %823
      %825 = vadd.xlane.f32.xlu0 %v791
      %v826 = vpop.xlane.xlu0 %825
      %827 = vadd.xlane.f32.xlu0 %v794
      %v828 = vpop.xlane.xlu0 %827
      %829 = vadd.xlane.f32.xlu0 %v797
      %v830 = vpop.xlane.xlu0 %829
      %831 = vadd.xlane.f32.xlu0 %v800
      %v832 = vpop.xlane.xlu0 %831
      %833 = vadd.xlane.f32.xlu0 %v803
      %v834 = vpop.xlane.xlu0 %833
      %835 = vadd.xlane.f32.xlu0 %v806
      %v836 = vpop.xlane.xlu0 %835
      %837 = vadd.xlane.f32.xlu0 %v809
      %v838 = vpop.xlane.xlu0 %837
      %v839 = vmul.f32 %v773, %v773
      %v840 = vmul.f32 %v776, %v776
      %v841 = vmul.f32 %v779, %v779
      %v842 = vmul.f32 %v782, %v782
      %v843 = vmul.f32 %v785, %v785
      %v844 = vmul.f32 %v788, %v788
      %v845 = vmul.f32 %v791, %v791
      %v846 = vmul.f32 %v794, %v794
      %v847 = vmul.f32 %v797, %v797
      %v848 = vmul.f32 %v800, %v800
      %v849 = vmul.f32 %v803, %v803
      %v850 = vmul.f32 %v806, %v806
      %v851 = vmul.f32 %v809, %v809
      %852 = vadd.xlane.f32.xlu0 %v839
      %v853 = vpop.xlane.xlu0 %852
      %854 = vadd.xlane.f32.xlu0 %v840
      %v855 = vpop.xlane.xlu0 %854
      %856 = vadd.xlane.f32.xlu0 %v841
      %v857 = vpop.xlane.xlu0 %856
      %858 = vadd.xlane.f32.xlu0 %v842
      %v859 = vpop.xlane.xlu0 %858
      %860 = vadd.xlane.f32.xlu0 %v843
      %v861 = vpop.xlane.xlu0 %860
      %862 = vadd.xlane.f32.xlu0 %v844
      %v863 = vpop.xlane.xlu0 %862
      %864 = vadd.xlane.f32.xlu0 %v845
      %v865 = vpop.xlane.xlu0 %864
      %866 = vadd.xlane.f32.xlu0 %v846
      %v867 = vpop.xlane.xlu0 %866
      %868 = vadd.xlane.f32.xlu0 %v847
      %v869 = vpop.xlane.xlu0 %868
      %870 = vadd.xlane.f32.xlu0 %v848
      %v871 = vpop.xlane.xlu0 %870
      %872 = vadd.xlane.f32.xlu0 %v849
      %v873 = vpop.xlane.xlu0 %872
      %874 = vadd.xlane.f32.xlu0 %v850
      %v875 = vpop.xlane.xlu0 %874
      %876 = vadd.xlane.f32.xlu0 %v851
      %v877 = vpop.xlane.xlu0 %876
      %v878 = vmul.f32 %v814, 0.03125
      %v879 = vmul.f32 %v816, 0.03125
      %v880 = vmul.f32 %v818, 0.03125
      %v881 = vmul.f32 %v820, 0.03125
      %v882 = vmul.f32 %v822, 0.03125
      %v883 = vmul.f32 %v824, 0.03125
      %v884 = vmul.f32 %v826, 0.03125
      %v885 = vmul.f32 %v828, 0.03125
      %v886 = vmul.f32 %v830, 0.03125
      %v887 = vmul.f32 %v832, 0.03125
      %v888 = vmul.f32 %v834, 0.03125
      %v889 = vmul.f32 %v836, 0.03125
      %v890 = vmul.f32 %v838, 0.03125
      %v891 = vmul.f32 %v853, 0.03125
      %v892 = vmul.f32 %v855, 0.03125
      %v893 = vmul.f32 %v857, 0.03125
      %v894 = vmul.f32 %v859, 0.03125
      %v895 = vmul.f32 %v861, 0.03125
      %v896 = vmul.f32 %v863, 0.03125
      %v897 = vmul.f32 %v865, 0.03125
      %v898 = vmul.f32 %v867, 0.03125
      %v899 = vmul.f32 %v869, 0.03125
      %v900 = vmul.f32 %v871, 0.03125
      %v901 = vmul.f32 %v873, 0.03125
      %v902 = vmul.f32 %v875, 0.03125
      %v903 = vmul.f32 %v877, 0.03125
      %v904 = vmul.f32 %v878, %v878
      %v905 = vmul.f32 %v879, %v879
      %v906 = vmul.f32 %v880, %v880
      %v907 = vmul.f32 %v881, %v881
      %v908 = vmul.f32 %v882, %v882
      %v909 = vmul.f32 %v883, %v883
      %v910 = vmul.f32 %v884, %v884
      %v911 = vmul.f32 %v885, %v885
      %v912 = vmul.f32 %v886, %v886
      %v913 = vmul.f32 %v887, %v887
      %v914 = vmul.f32 %v888, %v888
      %v915 = vmul.f32 %v889, %v889
      %v916 = vmul.f32 %v890, %v890
      %v917 = vsub.f32 %v891, %v904
      %v918 = vsub.f32 %v892, %v905
      %v919 = vsub.f32 %v893, %v906
      %v920 = vsub.f32 %v894, %v907
      %v921 = vsub.f32 %v895, %v908
      %v922 = vsub.f32 %v896, %v909
      %v923 = vsub.f32 %v897, %v910
      %v924 = vsub.f32 %v898, %v911
      %v925 = vsub.f32 %v899, %v912
      %v926 = vsub.f32 %v900, %v913
      %v927 = vsub.f32 %v901, %v914
      %v928 = vsub.f32 %v902, %v915
      %v929 = vsub.f32 %v903, %v916
      %v930 = vmax.f32 %v917, 0.0
      %v931 = vmax.f32 %v918, 0.0
      %v932 = vmax.f32 %v919, 0.0
      %v933 = vmax.f32 %v920, 0.0
      %v934 = vmax.f32 %v921, 0.0
      %v935 = vmax.f32 %v922, 0.0
      %v936 = vmax.f32 %v923, 0.0
      %v937 = vmax.f32 %v924, 0.0
      %v938 = vmax.f32 %v925, 0.0
      %v939 = vmax.f32 %v926, 0.0
      %v940 = vmax.f32 %v927, 0.0
      %v941 = vmax.f32 %v928, 0.0
      %v942 = vmax.f32 %v929, 0.0
      %v943 = vsub.f32 %v773, %v878
      %v944 = vsub.f32 %v776, %v879
      %v945 = vsub.f32 %v779, %v880
      %v946 = vsub.f32 %v782, %v881
      %v947 = vsub.f32 %v785, %v882
      %v948 = vsub.f32 %v788, %v883
      %v949 = vsub.f32 %v791, %v884
      %v950 = vsub.f32 %v794, %v885
      %v951 = vsub.f32 %v797, %v886
      %v952 = vsub.f32 %v800, %v887
      %v953 = vsub.f32 %v803, %v888
      %v954 = vsub.f32 %v806, %v889
      %v955 = vsub.f32 %v809, %v890
      %v956 = vadd.f32 %v930, 1e-05
      %v957 = vadd.f32 %v931, 1e-05
      %v958 = vadd.f32 %v932, 1e-05
      %v959 = vadd.f32 %v933, 1e-05
      %v960 = vadd.f32 %v934, 1e-05
      %v961 = vadd.f32 %v935, 1e-05
      %v962 = vadd.f32 %v936, 1e-05
      %v963 = vadd.f32 %v937, 1e-05
      %v964 = vadd.f32 %v938, 1e-05
      %v965 = vadd.f32 %v939, 1e-05
      %v966 = vadd.f32 %v940, 1e-05
      %v967 = vadd.f32 %v941, 1e-05
      %v968 = vadd.f32 %v942, 1e-05
      %v969 = vrsqrt.pop %v956
      %v970 = vmul.f32 %v969, %v956
      %v971 = vmul.f32 %v970, %v969
      %v972 = vmul.f32 0.5, %v971
      %v973 = vsub.f32 1.5, %v972
      %v974 = vmul.f32 %v969, %v973
      %vm975 = vweird.f32 %v956
      %vm976 = vweird.f32 %v969
      %vm977 = vmor %vm975, %vm976
      %v978 = vsel %vm977, %v969, %v974
      %v979 = vrsqrt.pop %v957
      %v980 = vmul.f32 %v979, %v957
      %v981 = vmul.f32 %v980, %v979
      %v982 = vmul.f32 0.5, %v981
      %v983 = vsub.f32 1.5, %v982
      %v984 = vmul.f32 %v979, %v983
      %vm985 = vweird.f32 %v957
      %vm986 = vweird.f32 %v979
      %vm987 = vmor %vm985, %vm986
      %v988 = vsel %vm987, %v979, %v984
      %v989 = vrsqrt.pop %v958
      %v990 = vmul.f32 %v989, %v958
      %v991 = vmul.f32 %v990, %v989
      %v992 = vmul.f32 0.5, %v991
      %v993 = vsub.f32 1.5, %v992
      %v994 = vmul.f32 %v989, %v993
      %vm995 = vweird.f32 %v958
      %vm996 = vweird.f32 %v989
      %vm997 = vmor %vm995, %vm996
      %v998 = vsel %vm997, %v989, %v994
      %v999 = vrsqrt.pop %v959
      %v1000 = vmul.f32 %v999, %v959
      %v1001 = vmul.f32 %v1000, %v999
      %v1002 = vmul.f32 0.5, %v1001
      %v1003 = vsub.f32 1.5, %v1002
      %v1004 = vmul.f32 %v999, %v1003
      %vm1005 = vweird.f32 %v959
      %vm1006 = vweird.f32 %v999
      %vm1007 = vmor %vm1005, %vm1006
      %v1008 = vsel %vm1007, %v999, %v1004
      %v1009 = vrsqrt.pop %v960
      %v1010 = vmul.f32 %v1009, %v960
      %v1011 = vmul.f32 %v1010, %v1009
      %v1012 = vmul.f32 0.5, %v1011
      %v1013 = vsub.f32 1.5, %v1012
      %v1014 = vmul.f32 %v1009, %v1013
      %vm1015 = vweird.f32 %v960
      %vm1016 = vweird.f32 %v1009
      %vm1017 = vmor %vm1015, %vm1016
      %v1018 = vsel %vm1017, %v1009, %v1014
      %v1019 = vrsqrt.pop %v961
      %v1020 = vmul.f32 %v1019, %v961
      %v1021 = vmul.f32 %v1020, %v1019
      %v1022 = vmul.f32 0.5, %v1021
      %v1023 = vsub.f32 1.5, %v1022
      %v1024 = vmul.f32 %v1019, %v1023
      %vm1025 = vweird.f32 %v961
      %vm1026 = vweird.f32 %v1019
      %vm1027 = vmor %vm1025, %vm1026
      %v1028 = vsel %vm1027, %v1019, %v1024
      %v1029 = vrsqrt.pop %v962
      %v1030 = vmul.f32 %v1029, %v962
      %v1031 = vmul.f32 %v1030, %v1029
      %v1032 = vmul.f32 0.5, %v1031
      %v1033 = vsub.f32 1.5, %v1032
      %v1034 = vmul.f32 %v1029, %v1033
      %vm1035 = vweird.f32 %v962
      %vm1036 = vweird.f32 %v1029
      %vm1037 = vmor %vm1035, %vm1036
      %v1038 = vsel %vm1037, %v1029, %v1034
      %v1039 = vrsqrt.pop %v963
      %v1040 = vmul.f32 %v1039, %v963
      %v1041 = vmul.f32 %v1040, %v1039
      %v1042 = vmul.f32 0.5, %v1041
      %v1043 = vsub.f32 1.5, %v1042
      %v1044 = vmul.f32 %v1039, %v1043
      %vm1045 = vweird.f32 %v963
      %vm1046 = vweird.f32 %v1039
      %vm1047 = vmor %vm1045, %vm1046
      %v1048 = vsel %vm1047, %v1039, %v1044
      %v1049 = vrsqrt.pop %v964
      %v1050 = vmul.f32 %v1049, %v964
      %v1051 = vmul.f32 %v1050, %v1049
      %v1052 = vmul.f32 0.5, %v1051
      %v1053 = vsub.f32 1.5, %v1052
      %v1054 = vmul.f32 %v1049, %v1053
      %vm1055 = vweird.f32 %v964
      %vm1056 = vweird.f32 %v1049
      %vm1057 = vmor %vm1055, %vm1056
      %v1058 = vsel %vm1057, %v1049, %v1054
      %v1059 = vrsqrt.pop %v965
      %v1060 = vmul.f32 %v1059, %v965
      %v1061 = vmul.f32 %v1060, %v1059
      %v1062 = vmul.f32 0.5, %v1061
      %v1063 = vsub.f32 1.5, %v1062
      %v1064 = vmul.f32 %v1059, %v1063
      %vm1065 = vweird.f32 %v965
      %vm1066 = vweird.f32 %v1059
      %vm1067 = vmor %vm1065, %vm1066
      %v1068 = vsel %vm1067, %v1059, %v1064
      %v1069 = vrsqrt.pop %v966
      %v1070 = vmul.f32 %v1069, %v966
      %v1071 = vmul.f32 %v1070, %v1069
      %v1072 = vmul.f32 0.5, %v1071
      %v1073 = vsub.f32 1.5, %v1072
      %v1074 = vmul.f32 %v1069, %v1073
      %vm1075 = vweird.f32 %v966
      %vm1076 = vweird.f32 %v1069
      %vm1077 = vmor %vm1075, %vm1076
      %v1078 = vsel %vm1077, %v1069, %v1074
      %v1079 = vrsqrt.pop %v967
      %v1080 = vmul.f32 %v1079, %v967
      %v1081 = vmul.f32 %v1080, %v1079
      %v1082 = vmul.f32 0.5, %v1081
      %v1083 = vsub.f32 1.5, %v1082
      %v1084 = vmul.f32 %v1079, %v1083
      %vm1085 = vweird.f32 %v967
      %vm1086 = vweird.f32 %v1079
      %vm1087 = vmor %vm1085, %vm1086
      %v1088 = vsel %vm1087, %v1079, %v1084
      %v1089 = vrsqrt.pop %v968
      %v1090 = vmul.f32 %v1089, %v968
      %v1091 = vmul.f32 %v1090, %v1089
      %v1092 = vmul.f32 0.5, %v1091
      %v1093 = vsub.f32 1.5, %v1092
      %v1094 = vmul.f32 %v1089, %v1093
      %vm1095 = vweird.f32 %v968
      %vm1096 = vweird.f32 %v1089
      %vm1097 = vmor %vm1095, %vm1096
      %v1098 = vsel %vm1097, %v1089, %v1094
      %v1099 = vmul.f32 %v943, %v978
      %v1100 = vmul.f32 %v944, %v988
      %v1101 = vmul.f32 %v945, %v998
      %v1102 = vmul.f32 %v946, %v1008
      %v1103 = vmul.f32 %v947, %v1018
      %v1104 = vmul.f32 %v948, %v1028
      %v1105 = vmul.f32 %v949, %v1038
      %v1106 = vmul.f32 %v950, %v1048
      %v1107 = vmul.f32 %v951, %v1058
      %v1108 = vmul.f32 %v952, %v1068
      %v1109 = vmul.f32 %v953, %v1078
      %v1110 = vmul.f32 %v954, %v1088
      %v1111 = vmul.f32 %v955, %v1098
      %v1112 = vperm.slane %v811, 0
      %v1113 = vmul.f32 %v1099, %v1112
      %v1114 = vmul.f32 %v1100, %v1112
      %v1115 = vmul.f32 %v1101, %v1112
      %v1116 = vmul.f32 %v1102, %v1112
      %v1117 = vmul.f32 %v1103, %v1112
      %v1118 = vmul.f32 %v1104, %v1112
      %v1119 = vmul.f32 %v1105, %v1112
      %v1120 = vmul.f32 %v1106, %v1112
      %v1121 = vmul.f32 %v1107, %v1112
      %v1122 = vmul.f32 %v1108, %v1112
      %v1123 = vmul.f32 %v1109, %v1112
      %v1124 = vmul.f32 %v1110, %v1112
      %v1125 = vmul.f32 %v1111, %v1112
      %v1126 = vperm.slane %v812, 0
      %v1127 = vadd.f32 %v1113, %v1126
      %v1128 = vadd.f32 %v1114, %v1126
      %v1129 = vadd.f32 %v1115, %v1126
      %v1130 = vadd.f32 %v1116, %v1126
      %v1131 = vadd.f32 %v1117, %v1126
      %v1132 = vadd.f32 %v1118, %v1126
      %v1133 = vadd.f32 %v1119, %v1126
      %v1134 = vadd.f32 %v1120, %v1126
      %v1135 = vadd.f32 %v1121, %v1126
      %v1136 = vadd.f32 %v1122, %v1126
      %v1137 = vadd.f32 %v1123, %v1126
      %v1138 = vadd.f32 %v1124, %v1126
      %v1139 = vadd.f32 %v1125, %v1126
      %v1140 = vmax.f32 %v1127, 0.0
      %v1141 = vmax.f32 %v1128, 0.0
      %v1142 = vmax.f32 %v1129, 0.0
      %v1143 = vmax.f32 %v1130, 0.0
      %v1144 = vmax.f32 %v1131, 0.0
      %v1145 = vmax.f32 %v1132, 0.0
      %v1146 = vmax.f32 %v1133, 0.0
      %v1147 = vmax.f32 %v1134, 0.0
      %v1148 = vmax.f32 %v1135, 0.0
      %v1149 = vmax.f32 %v1136, 0.0
      %v1150 = vmax.f32 %v1137, 0.0
      %v1151 = vmax.f32 %v1138, 0.0
      %v1152 = vmax.f32 %v1139, 0.0
      %v1153 = vld [vmem:[%s5] sm:$0xff]
      %v1154 = vld [vmem:[%s5 + $0x8] sm:$0xff]
      %v1155 = vld [vmem:[%s5 + $0x10] sm:$0xff]
      %v1156 = vld [vmem:[%s5 + $0x18] sm:$0xff]
      %v1157 = vld [vmem:[%s5 + $0x20] sm:$0xff]
      %v1158 = vld [vmem:[%s5 + $0x28] sm:$0xff]
      %v1159 = vld [vmem:[%s5 + $0x30] sm:$0xff]
      %v1160 = vld [vmem:[%s5 + $0x38] sm:$0xff]
      %v1161 = vld [vmem:[%s5 + $0x40] sm:$0xff]
      %v1162 = vld [vmem:[%s5 + $0x48] sm:$0xff]
      %v1163 = vld [vmem:[%s5 + $0x50] sm:$0xff]
      %v1164 = vld [vmem:[%s5 + $0x58] sm:$0xff]
      %v1165 = vld [vmem:[%s5 + $0x60] sm:$0xff]
      %v1166 = vld [vmem:[%s5 + $0x68] sm:$0xff]
      %v1167 = vld [vmem:[%s5 + $0x70] sm:$0xff]
      %v1168 = vld [vmem:[%s5 + $0x78] sm:$0xff]
      %v1169 = vld [vmem:[%s6] sm:$0x1]
      %v1170 = vperm.slane %v1169, 0
      %1171 = vmatpush.msra.mxu0 %v1168
      %1172 = vmatpush.msra.mxu0 %v1167
      %1173 = vmatpush.msra.mxu0 %v1166
      %1174 = vmatpush.msra.mxu0 %v1165
      %1175 = vmatpush.msra.mxu0 %v1164
      %1176 = vmatpush.msra.mxu0 %v1163
      %1177 = vmatpush.msra.mxu0 %v1162
      %1178 = vmatpush.msra.mxu0 %v1161
      %1179 = vmatpush.msra.mxu0 %v1160
      %1180 = vmatpush.msra.mxu0 %v1159
      %1181 = vmatpush.msra.mxu0 %v1158
      %1182 = vmatpush.msra.mxu0 %v1157
      %1183 = vmatpush.msra.mxu0 %v1156
      %1184 = vmatpush.msra.mxu0 %v1155
      %1185 = vmatpush.msra.mxu0 %v1154
      %1186 = vmatpush.msra.mxu0 %v1153
      %1187 = vmatmul.f32.gmra.mxu0 %v1140
      %v1188 = vpop.f32.mrf.mxu0
      %v1189 = vadd.f32 %v1170, %v1188
      %1190 = vmatmul.f32.gmra.mxu0 %v1141
      %v1191 = vpop.f32.mrf.mxu0
      %v1192 = vadd.f32 %v1170, %v1191
      %1193 = vmatmul.f32.gmra.mxu0 %v1142
      %v1194 = vpop.f32.mrf.mxu0
      %v1195 = vadd.f32 %v1170, %v1194
      %1196 = vmatmul.f32.gmra.mxu0 %v1143
      %v1197 = vpop.f32.mrf.mxu0
      %v1198 = vadd.f32 %v1170, %v1197
      %1199 = vmatmul.f32.gmra.mxu0 %v1144
      %v1200 = vpop.f32.mrf.mxu0
      %v1201 = vadd.f32 %v1170, %v1200
      %1202 = vmatmul.f32.gmra.mxu0 %v1145
      %v1203 = vpop.f32.mrf.mxu0
      %v1204 = vadd.f32 %v1170, %v1203
      %1205 = vmatmul.f32.gmra.mxu0 %v1146
      %v1206 = vpop.f32.mrf.mxu0
      %v1207 = vadd.f32 %v1170, %v1206
      %1208 = vmatmul.f32.gmra.mxu0 %v1147
      %v1209 = vpop.f32.mrf.mxu0
      %v1210 = vadd.f32 %v1170, %v1209
      %1211 = vmatmul.f32.gmra.mxu0 %v1148
      %v1212 = vpop.f32.mrf.mxu0
      %v1213 = vadd.f32 %v1170, %v1212
      %1214 = vmatmul.f32.gmra.mxu0 %v1149
      %v1215 = vpop.f32.mrf.mxu0
      %v1216 = vadd.f32 %v1170, %v1215
      %1217 = vmatmul.f32.gmra.mxu0 %v1150
      %v1218 = vpop.f32.mrf.mxu0
      %v1219 = vadd.f32 %v1170, %v1218
      %1220 = vmatmul.f32.gmra.mxu0 %v1151
      %v1221 = vpop.f32.mrf.mxu0
      %v1222 = vadd.f32 %v1170, %v1221
      %1223 = vmatmul.f32.gmra.mxu0 %v1152
      %v1224 = vpop.f32.mrf.mxu0
      %v1225 = vadd.f32 %v1170, %v1224
      %1226 = vdwg.mxu0
      %vm1227 = vcmask 64512
      %1228 = vst.msk [vmem:[%s280] sm:$0xff] %vm1227, %v1189
      %1229 = vst.msk [vmem:[%s280 + $0x8] sm:$0xff] %vm1227, %v1192
      %1230 = vst.msk [vmem:[%s280 + $0x10] sm:$0xff] %vm1227, %v1195
      %1231 = vst.msk [vmem:[%s280 + $0x18] sm:$0xff] %vm1227, %v1198
      %1232 = vst.msk [vmem:[%s280 + $0x20] sm:$0xff] %vm1227, %v1201
      %1233 = vst.msk [vmem:[%s280 + $0x28] sm:$0xff] %vm1227, %v1204
      %1234 = vst.msk [vmem:[%s280 + $0x30] sm:$0xff] %vm1227, %v1207
      %1235 = vst.msk [vmem:[%s280 + $0x38] sm:$0xff] %vm1227, %v1210
      %1236 = vst.msk [vmem:[%s280 + $0x40] sm:$0xff] %vm1227, %v1213
      %1237 = vst.msk [vmem:[%s280 + $0x48] sm:$0xff] %vm1227, %v1216
      %1238 = vst.msk [vmem:[%s280 + $0x50] sm:$0xff] %vm1227, %v1219
      %1239 = vst.msk [vmem:[%s280 + $0x58] sm:$0xff] %vm1227, %v1222
      %1240 = vst.msk [vmem:[%s280 + $0x60] sm:$0xff] %vm1227, %v1225
      %s1241 = smul.u32 13, %s18
      %p1242 = scmp.lt.s32.totalorder %s1241, 25
      %s1243 = scalar_select %p1242, %s1241, 25
      %s1244 = smul.addr %s1243, 8
      %s1245 = scalar_lea.vmem %s7, %s1244
      // Predicated region
      $region49: #{network_forward.1} parent=47 // pred_check
        %p1246 = pneg %p188
      $region50: #{network_forward.1} parent=47 // pred_check_branch
        %1248 = sbr.rel (%p1246) target = $region52
      $region51: #{network_forward.1} parent=47 // pred_region
        %s1249 = smul.u32 13, %s18
      $region52: #{network_forward.1} parent=47 // pred_fallthru
        _
    $region48: #{network_forward.1} parent=5 // pred_fallthru
      _
    %p1250 = scmp.le.s32.totalorder 2, %s13
    // Predicated region
    $region53: #{network_forward.1} parent=5 // pred_check
      %p1251 = pneg %p1250
    $region54: #{network_forward.1} parent=5 // pred_check_branch
      %1253 = sbr.rel (%p1251) target = $region56
    $region55: #{network_forward.1} parent=5 // pred_region
      %s1254 = ssub.s32 %s13, 2
      // Predicated region
      $region57: #{network_forward.1} parent=55 // pred_check
        %p1255 = pneg %p194
      $region58: #{network_forward.1} parent=55 // pred_check_branch
        %1257 = sbr.rel (%p1255) target = $region60
      $region59: #{network_forward.1} parent=55 // pred_region
        %s1258 = smul.u32 13, %s19
        %p1259 = scmp.lt.s32.totalorder %s1258, 25
        %s1260 = scalar_select %p1259, %s1258, 25
        %s1261 = smul.addr %s1260, 8
        %s1262 = scalar_lea.vmem %s7, %s1261
      $region60: #{network_forward.1} parent=55 // pred_fallthru
        _
    $region56: #{network_forward.1} parent=5 // pred_fallthru
      _
  $region6: #{network_forward.1} parent=0 // loop_footer
    %s17 = sadd.s32 1, %s13
  $region7: #{network_forward.1} parent=0 // loop_footer_branch
    %12 = sbr.rel target = $region3
  $region8: #{network_forward.1} parent=0 // loop_exit
    _

</llo_original>
